<compile_context>
chip_gen: v7x
topology: tpu7x:2x2x1
jax: 0.10.0
libtpu: 0.0.40
codegen_flags: <defaults>
</compile_context>

<pallas_src>
import functools

import jax
import jax.numpy as jnp
from jax import lax
from jax.experimental import pallas as pl
from jax.experimental.pallas import tpu as pltpu

_LANE = 128
_SUBLANE = 8


def _round_up(x, m):
    return (x + m - 1) // m * m


def _bprmf_kernel(user_ref, item_i_ref, item_j_ref,      # (1, TB) int32 index tiles
                  embed_user_t_ref, embed_item_t_ref,    # (F_pad, rows_pad) f32, resident
                  pred_i_ref, pred_j_ref):               # (1, TB) f32, lane-dense
    tb = user_ref.shape[1]
    n_user = embed_user_t_ref.shape[1]
    n_item = embed_item_t_ref.shape[1]

    u_idx = user_ref[...]        # (1, TB) int32
    i_idx = item_i_ref[...]
    j_idx = item_j_ref[...]

    # One-hot gather on the MXU.  Row iota broadcast against the (1, TB) index vector
    # (cheap sublane broadcast); table_T @ one_hot == gathered rows, transposed so the
    # batch lands on the 128-lane axis: (F_pad, TB).
    u_oh = (lax.broadcasted_iota(jnp.int32, (n_user, tb), 0) == u_idx).astype(jnp.float32)
    i_oh = (lax.broadcasted_iota(jnp.int32, (n_item, tb), 0) == i_idx).astype(jnp.float32)
    j_oh = (lax.broadcasted_iota(jnp.int32, (n_item, tb), 0) == j_idx).astype(jnp.float32)

    u_t = jnp.dot(embed_user_t_ref[...], u_oh, preferred_element_type=jnp.float32)   # (F_pad, TB)
    vi_t = jnp.dot(embed_item_t_ref[...], i_oh, preferred_element_type=jnp.float32)  # (F_pad, TB)
    vj_t = jnp.dot(embed_item_t_ref[...], j_oh, preferred_element_type=jnp.float32)  # (F_pad, TB)

    # (user * item).sum(dim=-1) for the whole tile at once; batch is on the lane axis
    # so the result is a single unmasked (1, TB) vector store per output.
    pred_i_ref[...] = jnp.sum(u_t * vi_t, axis=0, keepdims=True)
    pred_j_ref[...] = jnp.sum(u_t * vj_t, axis=0, keepdims=True)


@functools.partial(jax.jit, static_argnames=("batch_tile",))
def bprmf_forward(embed_user, embed_item, user, item_i, item_j, *, batch_tile=128):
    """Pallas implementation of BPRMFRecommender.forward.

    Args:
      embed_user: (num_user, factor_num) f32 embedding table.
      embed_item: (num_item, factor_num) f32 embedding table.
      user, item_i, item_j: integer index tensors, shape (B, 1) as used by
        fit()/predict() in the original module.
    Returns:
      (pred_i, pred_j), each with the same shape as the index tensors, f32.
    """
    num_user, factor_num = embed_user.shape
    num_item, _ = embed_item.shape
    out_shape_torch = user.shape                 # (B, 1): (B,1,F).sum(-1) -> (B,1)
    batch = user.size

    f_pad = _round_up(factor_num, _LANE)         # 200 -> 256: full 128-lane vregs
    nu_pad = _round_up(num_user, _SUBLANE)
    ni_pad = _round_up(num_item, _SUBLANE)
    b_pad = _round_up(max(batch, 1), batch_tile)

    # Zero-pad F / rows and store the tables transposed (F_pad, rows_pad) so the
    # gathered rows come out batch-on-lanes.  Padding never changes the result:
    # padded feature columns are zero and padded rows are never selected.
    eu_t = jnp.pad(embed_user.astype(jnp.float32),
                   ((0, nu_pad - num_user), (0, f_pad - factor_num))).T
    ei_t = jnp.pad(embed_item.astype(jnp.float32),
                   ((0, ni_pad - num_item), (0, f_pad - factor_num))).T

    def _prep_idx(idx, hi):
        flat = jnp.clip(idx.reshape(-1).astype(jnp.int32), 0, hi - 1)   # OOB-safe
        flat = jnp.pad(flat, (0, b_pad - batch))
        return flat.reshape(1, b_pad)

    u = _prep_idx(user, num_user)
    ii = _prep_idx(item_i, num_item)
    jj = _prep_idx(item_j, num_item)

    idx_spec = pl.BlockSpec((1, batch_tile), lambda t: (0, t))
    out_spec = pl.BlockSpec((1, batch_tile), lambda t: (0, t))
    table_u_spec = pl.BlockSpec((f_pad, nu_pad), lambda t: (0, 0))   # resident, re-used
    table_i_spec = pl.BlockSpec((f_pad, ni_pad), lambda t: (0, 0))

    pred_i, pred_j = pl.pallas_call(
        _bprmf_kernel,
        out_shape=(jax.ShapeDtypeStruct((1, b_pad), jnp.float32),
                   jax.ShapeDtypeStruct((1, b_pad), jnp.float32)),
        grid_spec=pltpu.PrefetchScalarGridSpec(
            num_scalar_prefetch=0,
            grid=(b_pad // batch_tile,),
            in_specs=[idx_spec, idx_spec, idx_spec, table_u_spec, table_i_spec],
            out_specs=(out_spec, out_spec),
        ),
        compiler_params=pltpu.CompilerParams(
            dimension_semantics=("parallel",)),   # v7x: both TCs split the batch grid
    )(u, ii, jj, eu_t, ei_t)

    pred_i = pred_i[0, :batch].reshape(out_shape_torch)
    pred_j = pred_j[0, :batch].reshape(out_shape_torch)
    return pred_i, pred_j


def _reference_forward(embed_user, embed_item, user, item_i, item_j):
    u = embed_user[user]         # (B, 1, F)
    vi = embed_item[item_i]      # (B, 1, F)
    vj = embed_item[item_j]      # (B, 1, F)
    return (u * vi).sum(-1), (u * vj).sum(-1)


if __name__ == "__main__":
    # Deterministic "module init": nn.Embedding weights ~ N(0, 0.01).
    num_user, num_item, factor_num = 16, 32, 200
    B = 8

    key = jax.random.PRNGKey(0)
    k_u, k_i, k_idx_u, k_idx_i, k_idx_j = jax.random.split(key, 5)
    embed_user = (0.01 * jax.random.normal(k_u, (num_user, factor_num))).astype(jnp.float32)
    embed_item = (0.01 * jax.random.normal(k_i, (num_item, factor_num))).astype(jnp.float32)

    user = jax.random.randint(k_idx_u, (B, 1), 0, num_user, dtype=jnp.int32)
    item_i = jax.random.randint(k_idx_i, (B, 1), 0, num_item, dtype=jnp.int32)
    item_j = jax.random.randint(k_idx_j, (B, 1), 0, num_item, dtype=jnp.int32)

    pred_i, pred_j = bprmf_forward(embed_user, embed_item, user, item_i, item_j)
    jax.block_until_ready((pred_i, pred_j))

    ref_i, ref_j = _reference_forward(embed_user, embed_item, user, item_i, item_j)
    assert pred_i.shape == (B, 1) and pred_j.shape == (B, 1)
    assert jnp.allclose(pred_i, ref_i, rtol=1e-5, atol=1e-6)
    assert jnp.allclose(pred_j, ref_j, rtol=1e-5, atol=1e-6)

    print("KERNEL_OK")
</pallas_src>

<mosaic_0001>
module attributes {stable_mosaic.version = 11 : i64} {
  func.func @_bprmf_kernel(%arg0: i32, %arg1: memref<1x128xi32, #tpu.memory_space<vmem>>, %arg2: memref<1x128xi32, #tpu.memory_space<vmem>>, %arg3: memref<1x128xi32, #tpu.memory_space<vmem>>, %arg4: memref<256x16xf32, #tpu.memory_space<vmem>>, %arg5: memref<256x32xf32, #tpu.memory_space<vmem>>, %arg6: memref<1x128xf32, #tpu.memory_space<vmem>>, %arg7: memref<1x128xf32, #tpu.memory_space<vmem>>) attributes {dimension_semantics = [#tpu.dimension_semantics<parallel>], iteration_bounds = array<i64: 1>, scalar_prefetch = 0 : i64, scratch_operands = 0 : i64, tpu.core_type = #tpu.core_type<tc>, window_params = [{transform_indices = @transform_0, window_bounds = array<i64: 1, 128>}, {transform_indices = @transform_1, window_bounds = array<i64: 1, 128>}, {transform_indices = @transform_2, window_bounds = array<i64: 1, 128>}, {pipeline_mode = #tpu.pipeline_mode<synchronous>, transform_indices = @transform_3, window_bounds = array<i64: 256, 16>}, {pipeline_mode = #tpu.pipeline_mode<synchronous>, transform_indices = @transform_4, window_bounds = array<i64: 256, 32>}, {transform_indices = @transform_5, window_bounds = array<i64: 1, 128>}, {transform_indices = @transform_6, window_bounds = array<i64: 1, 128>}]} {
    %c0 = arith.constant 0 : index
    %c0_0 = arith.constant 0 : index
    %0 = vector.load %arg1[%c0, %c0_0] : memref<1x128xi32, #tpu.memory_space<vmem>>, vector<1x128xi32>
    %c0_1 = arith.constant 0 : index
    %c0_2 = arith.constant 0 : index
    %1 = vector.load %arg2[%c0_1, %c0_2] : memref<1x128xi32, #tpu.memory_space<vmem>>, vector<1x128xi32>
    %c0_3 = arith.constant 0 : index
    %c0_4 = arith.constant 0 : index
    %2 = vector.load %arg3[%c0_3, %c0_4] : memref<1x128xi32, #tpu.memory_space<vmem>>, vector<1x128xi32>
    %3 = tpu.iota {dimensions = array<i32: 0>} : vector<16x128xi32>
    %4 = vector.broadcast %0 : vector<1x128xi32> to vector<16x128xi32>
    %5 = arith.cmpi eq, %3, %4 : vector<16x128xi32>
    %6 = arith.extui %5 : vector<16x128xi1> to vector<16x128xi32>
    %7 = arith.sitofp %6 : vector<16x128xi32> to vector<16x128xf32>
    %8 = tpu.iota {dimensions = array<i32: 0>} : vector<32x128xi32>
    %9 = vector.broadcast %1 : vector<1x128xi32> to vector<32x128xi32>
    %10 = arith.cmpi eq, %8, %9 : vector<32x128xi32>
    %11 = arith.extui %10 : vector<32x128xi1> to vector<32x128xi32>
    %12 = arith.sitofp %11 : vector<32x128xi32> to vector<32x128xf32>
    %13 = tpu.iota {dimensions = array<i32: 0>} : vector<32x128xi32>
    %14 = vector.broadcast %2 : vector<1x128xi32> to vector<32x128xi32>
    %15 = arith.cmpi eq, %13, %14 : vector<32x128xi32>
    %16 = arith.extui %15 : vector<32x128xi1> to vector<32x128xi32>
    %17 = arith.sitofp %16 : vector<32x128xi32> to vector<32x128xf32>
    %c0_5 = arith.constant 0 : index
    %c0_6 = arith.constant 0 : index
    %18 = vector.load %arg4[%c0_5, %c0_6] : memref<256x16xf32, #tpu.memory_space<vmem>>, vector<256x16xf32>
    %cst = arith.constant dense<0.000000e+00> : vector<256x128xf32>
    %19 = tpu.matmul %18, %7, %cst {dimension_numbers = #tpu.dot_dimension_numbers<[1], [0], [0], [1], [0, 0, 1, 1], [], []>} : vector<256x16xf32>, vector<16x128xf32>, vector<256x128xf32> -> vector<256x128xf32>
    %c0_7 = arith.constant 0 : index
    %c0_8 = arith.constant 0 : index
    %20 = vector.load %arg5[%c0_7, %c0_8] : memref<256x32xf32, #tpu.memory_space<vmem>>, vector<256x32xf32>
    %cst_9 = arith.constant dense<0.000000e+00> : vector<256x128xf32>
    %21 = tpu.matmul %20, %12, %cst_9 {dimension_numbers = #tpu.dot_dimension_numbers<[1], [0], [0], [1], [0, 0, 1, 1], [], []>} : vector<256x32xf32>, vector<32x128xf32>, vector<256x128xf32> -> vector<256x128xf32>
    %c0_10 = arith.constant 0 : index
    %c0_11 = arith.constant 0 : index
    %22 = vector.load %arg5[%c0_10, %c0_11] : memref<256x32xf32, #tpu.memory_space<vmem>>, vector<256x32xf32>
    %cst_12 = arith.constant dense<0.000000e+00> : vector<256x128xf32>
    %23 = tpu.matmul %22, %17, %cst_12 {dimension_numbers = #tpu.dot_dimension_numbers<[1], [0], [0], [1], [0, 0, 1, 1], [], []>} : vector<256x32xf32>, vector<32x128xf32>, vector<256x128xf32> -> vector<256x128xf32>
    %24 = arith.mulf %19, %21 : vector<256x128xf32>
    %cst_13 = arith.constant dense<0.000000e+00> : vector<128xf32>
    %25 = vector.multi_reduction <add>, %24, %cst_13 [0] : vector<256x128xf32> to vector<128xf32>
    %26 = vector.shape_cast %25 : vector<128xf32> to vector<1x128xf32>
    %c0_14 = arith.constant 0 : index
    %c0_15 = arith.constant 0 : index
    %27 = vector.load %arg6[%c0_14, %c0_15] : memref<1x128xf32, #tpu.memory_space<vmem>>, vector<1x128xf32>
    tpu.vector_store %arg6[%c0_14, %c0_15], %26 {strides = array<i32>} : memref<1x128xf32, #tpu.memory_space<vmem>>, vector<1x128xf32>,
    %28 = arith.mulf %19, %23 : vector<256x128xf32>
    %cst_16 = arith.constant dense<0.000000e+00> : vector<128xf32>
    %29 = vector.multi_reduction <add>, %28, %cst_16 [0] : vector<256x128xf32> to vector<128xf32>
    %30 = vector.shape_cast %29 : vector<128xf32> to vector<1x128xf32>
    %c0_17 = arith.constant 0 : index
    %c0_18 = arith.constant 0 : index
    %31 = vector.load %arg7[%c0_17, %c0_18] : memref<1x128xf32, #tpu.memory_space<vmem>>, vector<1x128xf32>
    tpu.vector_store %arg7[%c0_17, %c0_18], %30 {strides = array<i32>} : memref<1x128xf32, #tpu.memory_space<vmem>>, vector<1x128xf32>,
    return
  }
  func.func @transform_0(%arg0: i32) -> (i32, i32) {
    %c0_i32 = arith.constant 0 : i32
    %c0_i32_0 = arith.constant 0 : i32
    return %c0_i32, %arg0 : i32, i32
  }
  func.func @transform_1(%arg0: i32) -> (i32, i32) {
    %c0_i32 = arith.constant 0 : i32
    %c0_i32_0 = arith.constant 0 : i32
    return %c0_i32, %arg0 : i32, i32
  }
  func.func @transform_2(%arg0: i32) -> (i32, i32) {
    %c0_i32 = arith.constant 0 : i32
    %c0_i32_0 = arith.constant 0 : i32
    return %c0_i32, %arg0 : i32, i32
  }
  func.func @transform_3(%arg0: i32) -> (i32, i32) {
    %c0_i32 = arith.constant 0 : i32
    %c0_i32_0 = arith.constant 0 : i32
    %c0_i32_1 = arith.constant 0 : i32
    return %c0_i32, %c0_i32_0 : i32, i32
  }
  func.func @transform_4(%arg0: i32) -> (i32, i32) {
    %c0_i32 = arith.constant 0 : i32
    %c0_i32_0 = arith.constant 0 : i32
    %c0_i32_1 = arith.constant 0 : i32
    return %c0_i32, %c0_i32_0 : i32, i32
  }
  func.func @transform_5(%arg0: i32) -> (i32, i32) {
    %c0_i32 = arith.constant 0 : i32
    %c0_i32_0 = arith.constant 0 : i32
    return %c0_i32, %arg0 : i32, i32
  }
  func.func @transform_6(%arg0: i32) -> (i32, i32) {
    %c0_i32 = arith.constant 0 : i32
    %c0_i32_0 = arith.constant 0 : i32
    return %c0_i32, %arg0 : i32, i32
  }
}

</mosaic_0001>

<llo_original>
// kernel: bprmf_forward.1
$region0: #{bprmf_forward.1}
  #allocation0 [shape = 'u32[]', space=smem, size = 0x4, offset = 0x4, fixed_abs, tag = 'smem constant byte address 0x4 - core index']
  #allocation1 [shape = 'u32[144,128]{1,0:T(1,128)}', space=vmem, size = 0x12000, scoped, tag = 'internal scratch']
  %s0 = inlined_call_operand.vmem [shape: s32[1,128], index: 0, kind: input, shape index: {}]
  %s1 = inlined_call_operand.vmem [shape: s32[1,128], index: 1, kind: input, shape index: {}]
  %s2 = inlined_call_operand.vmem [shape: s32[1,128], index: 2, kind: input, shape index: {}]
  %s3 = inlined_call_operand.vmem [shape: f32[256,16], index: 3, kind: input, shape index: {}]
  %s4 = inlined_call_operand.vmem [shape: f32[256,32], index: 4, kind: input, shape index: {}]
  %s5 = inlined_call_operand.vmem [shape: f32[1,128], index: 5, kind: output, shape index: {0}]
  %s6 = inlined_call_operand.vmem [shape: f32[1,128], index: 6, kind: output, shape index: {1}]
  %7 = xla_tuple %s5, %s6
  %s8 = sld [smem:[#allocation0]]
  $region38: #{bprmf_forward.1} parent=0
    _
  %s10 = ssub.s32 1, %s8
  %s11 = scalar_select 0, %s10, %s8
  // Predicated region
  $region2: #{bprmf_forward.1} parent=0 // pred_check
    _
  $region3: #{bprmf_forward.1} parent=0 // pred_check_branch
    %13 = sbr.rel (0) target = $region5
  $region4: #{bprmf_forward.1} parent=0 // pred_region
    _
  $region5: #{bprmf_forward.1} parent=0 // pred_fallthru
    _
  // Predicated region
  $region6: #{bprmf_forward.1} parent=0 // pred_check
    _
  $region7: #{bprmf_forward.1} parent=0 // pred_check_branch
    %15 = sbr.rel (0) target = $region9
  $region8: #{bprmf_forward.1} parent=0 // pred_region
    _
  $region9: #{bprmf_forward.1} parent=0 // pred_fallthru
    _
  // Predicated region
  $region10: #{bprmf_forward.1} parent=0 // pred_check
    _
  $region11: #{bprmf_forward.1} parent=0 // pred_check_branch
    %17 = sbr.rel (0) target = $region13
  $region12: #{bprmf_forward.1} parent=0 // pred_region
    _
  $region13: #{bprmf_forward.1} parent=0 // pred_fallthru
    _
  // Predicated region
  $region14: #{bprmf_forward.1} parent=0 // pred_check
    _
  $region15: #{bprmf_forward.1} parent=0 // pred_check_branch
    %19 = sbr.rel (0) target = $region17
  $region16: #{bprmf_forward.1} parent=0 // pred_region
    _
  $region17: #{bprmf_forward.1} parent=0 // pred_fallthru
    _
  // Predicated region
  $region18: #{bprmf_forward.1} parent=0 // pred_check
    _
  $region19: #{bprmf_forward.1} parent=0 // pred_check_branch
    %21 = sbr.rel (0) target = $region21
  $region20: #{bprmf_forward.1} parent=0 // pred_region
    _
  $region21: #{bprmf_forward.1} parent=0 // pred_fallthru
    _
  %v22 = vld [vmem:[%s0] sm:$0x1]
  %v23 = vld [vmem:[%s1] sm:$0x1]
  %v24 = vld [vmem:[%s2] sm:$0x1]
  %v25 = vlaneseq
  %v26 = vshrl.u32 %v25, 7
  %v27 = vadd.s32 %v26, 8
  %v28 = vlaneseq
  %v29 = vshrl.u32 %v28, 7
  %v30 = vsub.s32 0, %v29
  %v31 = vrot.slane %v22, %v30
  %vm32 = vcmp.eq.s32.totalorder %v26, %v31
  %vm33 = vcmp.eq.s32.totalorder %v27, %v31
  %v34 = vsel %vm32, 1, 0
  %v35 = vsel %vm33, 1, 0
  %v36 = vcvt.s32.f32 %v34
  %v37 = vcvt.s32.f32 %v35
  %v38 = vadd.s32 %v26, 16
  %v39 = vadd.s32 %v26, 24
  %v40 = vlaneseq
  %v41 = vshrl.u32 %v40, 7
  %v42 = vsub.s32 0, %v41
  %v43 = vrot.slane %v23, %v42
  %vm44 = vcmp.eq.s32.totalorder %v26, %v43
  %vm45 = vcmp.eq.s32.totalorder %v27, %v43
  %vm46 = vcmp.eq.s32.totalorder %v38, %v43
  %vm47 = vcmp.eq.s32.totalorder %v39, %v43
  %v48 = vsel %vm44, 1, 0
  %v49 = vsel %vm45, 1, 0
  %v50 = vsel %vm46, 1, 0
  %v51 = vsel %vm47, 1, 0
  %v52 = vcvt.s32.f32 %v48
  %v53 = vcvt.s32.f32 %v49
  %v54 = vcvt.s32.f32 %v50
  %v55 = vcvt.s32.f32 %v51
  %v56 = vlaneseq
  %v57 = vshrl.u32 %v56, 7
  %v58 = vsub.s32 0, %v57
  %v59 = vrot.slane %v24, %v58
  %vm60 = vcmp.eq.s32.totalorder %v26, %v59
  %vm61 = vcmp.eq.s32.totalorder %v27, %v59
  %vm62 = vcmp.eq.s32.totalorder %v38, %v59
  %vm63 = vcmp.eq.s32.totalorder %v39, %v59
  %v64 = vsel %vm60, 1, 0
  %v65 = vsel %vm61, 1, 0
  %v66 = vsel %vm62, 1, 0
  %v67 = vsel %vm63, 1, 0
  %v68 = vcvt.s32.f32 %v64
  %v69 = vcvt.s32.f32 %v65
  %v70 = vcvt.s32.f32 %v66
  %v71 = vcvt.s32.f32 %v67
  %v72 = vld [vmem:[%s3] sm:$0xff]
  %v73 = vld [vmem:[%s3 + $0x8] sm:$0xff]
  %v74 = vld [vmem:[%s3 + $0x10] sm:$0xff]
  %v75 = vld [vmem:[%s3 + $0x18] sm:$0xff]
  %v76 = vld [vmem:[%s3 + $0x20] sm:$0xff]
  %v77 = vld [vmem:[%s3 + $0x28] sm:$0xff]
  %v78 = vld [vmem:[%s3 + $0x30] sm:$0xff]
  %v79 = vld [vmem:[%s3 + $0x38] sm:$0xff]
  %v80 = vld [vmem:[%s3 + $0x40] sm:$0xff]
  %v81 = vld [vmem:[%s3 + $0x48] sm:$0xff]
  %v82 = vld [vmem:[%s3 + $0x50] sm:$0xff]
  %v83 = vld [vmem:[%s3 + $0x58] sm:$0xff]
  %v84 = vld [vmem:[%s3 + $0x60] sm:$0xff]
  %v85 = vld [vmem:[%s3 + $0x68] sm:$0xff]
  %v86 = vld [vmem:[%s3 + $0x70] sm:$0xff]
  %v87 = vld [vmem:[%s3 + $0x78] sm:$0xff]
  %v88 = vld [vmem:[%s3 + $0x80] sm:$0xff]
  %v89 = vld [vmem:[%s3 + $0x88] sm:$0xff]
  %v90 = vld [vmem:[%s3 + $0x90] sm:$0xff]
  %v91 = vld [vmem:[%s3 + $0x98] sm:$0xff]
  %v92 = vld [vmem:[%s3 + $0xa0] sm:$0xff]
  %v93 = vld [vmem:[%s3 + $0xa8] sm:$0xff]
  %v94 = vld [vmem:[%s3 + $0xb0] sm:$0xff]
  %v95 = vld [vmem:[%s3 + $0xb8] sm:$0xff]
  %v96 = vld [vmem:[%s3 + $0xc0] sm:$0xff]
  %v97 = vld [vmem:[%s3 + $0xc8] sm:$0xff]
  %v98 = vld [vmem:[%s3 + $0xd0] sm:$0xff]
  %v99 = vld [vmem:[%s3 + $0xd8] sm:$0xff]
  %v100 = vld [vmem:[%s3 + $0xe0] sm:$0xff]
  %v101 = vld [vmem:[%s3 + $0xe8] sm:$0xff]
  %v102 = vld [vmem:[%s3 + $0xf0] sm:$0xff]
  %v103 = vld [vmem:[%s3 + $0xf8] sm:$0xff]
  %vm104 = vcmask 130048
  %v106 = vsel %vm104, %v72, 0
  %v109 = vsel %vm104, %v73, 0
  %v112 = vsel %vm104, %v74, 0
  %v115 = vsel %vm104, %v75, 0
  %v118 = vsel %vm104, %v76, 0
  %v121 = vsel %vm104, %v77, 0
  %v124 = vsel %vm104, %v78, 0
  %v127 = vsel %vm104, %v79, 0
  %v130 = vsel %vm104, %v80, 0
  %v133 = vsel %vm104, %v81, 0
  %v136 = vsel %vm104, %v82, 0
  %v139 = vsel %vm104, %v83, 0
  %v142 = vsel %vm104, %v84, 0
  %v145 = vsel %vm104, %v85, 0
  %v148 = vsel %vm104, %v86, 0
  %v151 = vsel %vm104, %v87, 0
  %v154 = vsel %vm104, %v88, 0
  %v157 = vsel %vm104, %v89, 0
  %v160 = vsel %vm104, %v90, 0
  %v163 = vsel %vm104, %v91, 0
  %v166 = vsel %vm104, %v92, 0
  %v169 = vsel %vm104, %v93, 0
  %v172 = vsel %vm104, %v94, 0
  %v175 = vsel %vm104, %v95, 0
  %v178 = vsel %vm104, %v96, 0
  %v181 = vsel %vm104, %v97, 0
  %v184 = vsel %vm104, %v98, 0
  %v187 = vsel %vm104, %v99, 0
  %v190 = vsel %vm104, %v100, 0
  %v193 = vsel %vm104, %v101, 0
  %v196 = vsel %vm104, %v102, 0
  %v199 = vsel %vm104, %v103, 0
  %201 = vmatprep.subr.mxu0 0.0
  %202 = vmatpush1.msra.mxu0 %v36
  %203 = vmatprep.subr.mxu0 0.0
  %204 = vmatpush1.msra.mxu0 %v37
  %205 = vmatprep.subr.mxu0 0.0
  %206 = vmatpush1.msra.mxu0 0.0
  %207 = vmatprep.subr.mxu0 0.0
  %208 = vmatpush1.msra.mxu0 0.0
  %209 = vmatprep.subr.mxu0 0.0
  %210 = vmatpush1.msra.mxu0 0.0
  %211 = vmatprep.subr.mxu0 0.0
  %212 = vmatpush1.msra.mxu0 0.0
  %213 = vmatprep.subr.mxu0 0.0
  %214 = vmatpush1.msra.mxu0 0.0
  %215 = vmatprep.subr.mxu0 0.0
  %216 = vmatpush1.msra.mxu0 0.0
  %217 = vmatprep.subr.mxu0 0.0
  %218 = vmatpush1.msra.mxu0 0.0
  %219 = vmatprep.subr.mxu0 0.0
  %220 = vmatpush1.msra.mxu0 0.0
  %221 = vmatprep.subr.mxu0 0.0
  %222 = vmatpush1.msra.mxu0 0.0
  %223 = vmatprep.subr.mxu0 0.0
  %224 = vmatpush1.msra.mxu0 0.0
  %225 = vmatprep.subr.mxu0 0.0
  %226 = vmatpush1.msra.mxu0 0.0
  %227 = vmatprep.subr.mxu0 0.0
  %228 = vmatpush1.msra.mxu0 0.0
  %229 = vmatprep.subr.mxu0 0.0
  %230 = vmatpush1.msra.mxu0 0.0
  %231 = vmatprep.subr.mxu0 0.0
  %232 = vmatpush1.msra.mxu0 0.0
  %233 = vmatprep.subr.mxu0 0.0
  %234 = vmatpush1.msra.mxu0 0.0
  %235 = vmatprep.subr.mxu0 0.0
  %236 = vmatpush1.msra.mxu0 0.0
  %237 = vmatprep.subr.mxu0 0.0
  %238 = vmatpush1.msra.mxu0 0.0
  %239 = vmatprep.subr.mxu0 0.0
  %240 = vmatpush1.msra.mxu0 0.0
  %241 = vmatprep.subr.mxu0 0.0
  %242 = vmatpush1.msra.mxu0 0.0
  %243 = vmatprep.subr.mxu0 0.0
  %244 = vmatpush1.msra.mxu0 0.0
  %245 = vmatprep.subr.mxu0 0.0
  %246 = vmatpush1.msra.mxu0 0.0
  %247 = vmatprep.subr.mxu0 0.0
  %248 = vmatpush1.msra.mxu0 0.0
  %249 = vmatprep.subr.mxu0 0.0
  %250 = vmatpush1.msra.mxu0 0.0
  %251 = vmatprep.subr.mxu0 0.0
  %252 = vmatpush1.msra.mxu0 0.0
  %253 = vmatprep.subr.mxu0 0.0
  %254 = vmatpush1.msra.mxu0 0.0
  %255 = vmatprep.subr.mxu0 0.0
  %256 = vmatpush1.msra.mxu0 0.0
  %257 = vmatprep.subr.mxu0 0.0
  %258 = vmatpush1.msra.mxu0 0.0
  %259 = vmatprep.subr.mxu0 0.0
  %260 = vmatpush1.msra.mxu0 0.0
  %261 = vmatprep.subr.mxu0 0.0
  %262 = vmatpush1.msra.mxu0 0.0
  %263 = vmatprep.subr.mxu0 0.0
  %264 = vmatpush1.msra.mxu0 0.0
  %265 = vmatprep.mubr.f32.mxu0 0.0
  %266 = vmatmul.mubr.f32.gmra.mrb[0].mxu0 %v106
  %v267 = vpop.f32.mrb[0].mxu0
  %v268 = vadd.f32 0.0, %v267
  %v269 = vpop.f32.mrb[0].mxu0
  %270 = vmatprep.mubr.f32.mxu0 0.0
  %271 = vmatmul.mubr.f32.gmra.mrb[0].mxu0 %v109
  %v272 = vpop.f32.mrb[0].mxu0
  %v273 = vadd.f32 0.0, %v272
  %v274 = vpop.f32.mrb[0].mxu0
  %275 = vmatprep.mubr.f32.mxu0 0.0
  %276 = vmatmul.mubr.f32.gmra.mrb[0].mxu0 %v112
  %v277 = vpop.f32.mrb[0].mxu0
  %v278 = vadd.f32 0.0, %v277
  %v279 = vpop.f32.mrb[0].mxu0
  %280 = vmatprep.mubr.f32.mxu0 0.0
  %281 = vmatmul.mubr.f32.gmra.mrb[0].mxu0 %v115
  %v282 = vpop.f32.mrb[0].mxu0
  %v283 = vadd.f32 0.0, %v282
  %v284 = vpop.f32.mrb[0].mxu0
  %285 = vmatprep.mubr.f32.mxu0 0.0
  %286 = vmatmul.mubr.f32.gmra.mrb[0].mxu0 %v118
  %v287 = vpop.f32.mrb[0].mxu0
  %v288 = vadd.f32 0.0, %v287
  %v289 = vpop.f32.mrb[0].mxu0
  %290 = vmatprep.mubr.f32.mxu0 0.0
  %291 = vmatmul.mubr.f32.gmra.mrb[0].mxu0 %v121
  %v292 = vpop.f32.mrb[0].mxu0
  %v293 = vadd.f32 0.0, %v292
  %v294 = vpop.f32.mrb[0].mxu0
  %295 = vmatprep.mubr.f32.mxu0 0.0
  %296 = vmatmul.mubr.f32.gmra.mrb[0].mxu0 %v124
  %v297 = vpop.f32.mrb[0].mxu0
  %v298 = vadd.f32 0.0, %v297
  %v299 = vpop.f32.mrb[0].mxu0
  %300 = vmatprep.mubr.f32.mxu0 0.0
  %301 = vmatmul.mubr.f32.gmra.mrb[0].mxu0 %v127
  %v302 = vpop.f32.mrb[0].mxu0
  %v303 = vadd.f32 0.0, %v302
  %v304 = vpop.f32.mrb[0].mxu0
  %305 = vmatprep.mubr.f32.mxu0 0.0
  %306 = vmatmul.mubr.f32.gmra.mrb[0].mxu0 %v130
  %v307 = vpop.f32.mrb[0].mxu0
  %v308 = vadd.f32 0.0, %v307
  %v309 = vpop.f32.mrb[0].mxu0
  %310 = vmatprep.mubr.f32.mxu0 0.0
  %311 = vmatmul.mubr.f32.gmra.mrb[0].mxu0 %v133
  %v312 = vpop.f32.mrb[0].mxu0
  %v313 = vadd.f32 0.0, %v312
  %v314 = vpop.f32.mrb[0].mxu0
  %315 = vmatprep.mubr.f32.mxu0 0.0
  %316 = vmatmul.mubr.f32.gmra.mrb[0].mxu0 %v136
  %v317 = vpop.f32.mrb[0].mxu0
  %v318 = vadd.f32 0.0, %v317
  %v319 = vpop.f32.mrb[0].mxu0
  %320 = vmatprep.mubr.f32.mxu0 0.0
  %321 = vmatmul.mubr.f32.gmra.mrb[0].mxu0 %v139
  %v322 = vpop.f32.mrb[0].mxu0
  %v323 = vadd.f32 0.0, %v322
  %v324 = vpop.f32.mrb[0].mxu0
  %325 = vmatprep.mubr.f32.mxu0 0.0
  %326 = vmatmul.mubr.f32.gmra.mrb[0].mxu0 %v142
  %v327 = vpop.f32.mrb[0].mxu0
  %v328 = vadd.f32 0.0, %v327
  %v329 = vpop.f32.mrb[0].mxu0
  %330 = vmatprep.mubr.f32.mxu0 0.0
  %331 = vmatmul.mubr.f32.gmra.mrb[0].mxu0 %v145
  %v332 = vpop.f32.mrb[0].mxu0
  %v333 = vadd.f32 0.0, %v332
  %v334 = vpop.f32.mrb[0].mxu0
  %335 = vmatprep.mubr.f32.mxu0 0.0
  %336 = vmatmul.mubr.f32.gmra.mrb[0].mxu0 %v148
  %v337 = vpop.f32.mrb[0].mxu0
  %v338 = vadd.f32 0.0, %v337
  %v339 = vpop.f32.mrb[0].mxu0
  %340 = vmatprep.mubr.f32.mxu0 0.0
  %341 = vmatmul.mubr.f32.gmra.mrb[0].mxu0 %v151
  %v342 = vpop.f32.mrb[0].mxu0
  %v343 = vadd.f32 0.0, %v342
  %v344 = vpop.f32.mrb[0].mxu0
  %345 = vmatprep.mubr.f32.mxu0 0.0
  %346 = vmatmul.mubr.f32.gmra.mrb[0].mxu0 %v154
  %v347 = vpop.f32.mrb[0].mxu0
  %v348 = vadd.f32 0.0, %v347
  %v349 = vpop.f32.mrb[0].mxu0
  %350 = vmatprep.mubr.f32.mxu0 0.0
  %351 = vmatmul.mubr.f32.gmra.mrb[0].mxu0 %v157
  %v352 = vpop.f32.mrb[0].mxu0
  %v353 = vadd.f32 0.0, %v352
  %v354 = vpop.f32.mrb[0].mxu0
  %355 = vmatprep.mubr.f32.mxu0 0.0
  %356 = vmatmul.mubr.f32.gmra.mrb[0].mxu0 %v160
  %v357 = vpop.f32.mrb[0].mxu0
  %v358 = vadd.f32 0.0, %v357
  %v359 = vpop.f32.mrb[0].mxu0
  %360 = vmatprep.mubr.f32.mxu0 0.0
  %361 = vmatmul.mubr.f32.gmra.mrb[0].mxu0 %v163
  %v362 = vpop.f32.mrb[0].mxu0
  %v363 = vadd.f32 0.0, %v362
  %v364 = vpop.f32.mrb[0].mxu0
  %365 = vmatprep.mubr.f32.mxu0 0.0
  %366 = vmatmul.mubr.f32.gmra.mrb[0].mxu0 %v166
  %v367 = vpop.f32.mrb[0].mxu0
  %v368 = vadd.f32 0.0, %v367
  %v369 = vpop.f32.mrb[0].mxu0
  %370 = vmatprep.mubr.f32.mxu0 0.0
  %371 = vmatmul.mubr.f32.gmra.mrb[0].mxu0 %v169
  %v372 = vpop.f32.mrb[0].mxu0
  %v373 = vadd.f32 0.0, %v372
  %v374 = vpop.f32.mrb[0].mxu0
  %375 = vmatprep.mubr.f32.mxu0 0.0
  %376 = vmatmul.mubr.f32.gmra.mrb[0].mxu0 %v172
  %v377 = vpop.f32.mrb[0].mxu0
  %v378 = vadd.f32 0.0, %v377
  %v379 = vpop.f32.mrb[0].mxu0
  %380 = vmatprep.mubr.f32.mxu0 0.0
  %381 = vmatmul.mubr.f32.gmra.mrb[0].mxu0 %v175
  %v382 = vpop.f32.mrb[0].mxu0
  %v383 = vadd.f32 0.0, %v382
  %v384 = vpop.f32.mrb[0].mxu0
  %385 = vmatprep.mubr.f32.mxu0 0.0
  %386 = vmatmul.mubr.f32.gmra.mrb[0].mxu0 %v178
  %v387 = vpop.f32.mrb[0].mxu0
  %v388 = vadd.f32 0.0, %v387
  %v389 = vpop.f32.mrb[0].mxu0
  %390 = vmatprep.mubr.f32.mxu0 0.0
  %391 = vmatmul.mubr.f32.gmra.mrb[0].mxu0 %v181
  %v392 = vpop.f32.mrb[0].mxu0
  %v393 = vadd.f32 0.0, %v392
  %v394 = vpop.f32.mrb[0].mxu0
  %395 = vmatprep.mubr.f32.mxu0 0.0
  %396 = vmatmul.mubr.f32.gmra.mrb[0].mxu0 %v184
  %v397 = vpop.f32.mrb[0].mxu0
  %v398 = vadd.f32 0.0, %v397
  %v399 = vpop.f32.mrb[0].mxu0
  %400 = vmatprep.mubr.f32.mxu0 0.0
  %401 = vmatmul.mubr.f32.gmra.mrb[0].mxu0 %v187
  %v402 = vpop.f32.mrb[0].mxu0
  %v403 = vadd.f32 0.0, %v402
  %v404 = vpop.f32.mrb[0].mxu0
  %405 = vmatprep.mubr.f32.mxu0 0.0
  %406 = vmatmul.mubr.f32.gmra.mrb[0].mxu0 %v190
  %v407 = vpop.f32.mrb[0].mxu0
  %v408 = vadd.f32 0.0, %v407
  %v409 = vpop.f32.mrb[0].mxu0
  %410 = vmatprep.mubr.f32.mxu0 0.0
  %411 = vmatmul.mubr.f32.gmra.mrb[0].mxu0 %v193
  %v412 = vpop.f32.mrb[0].mxu0
  %v413 = vadd.f32 0.0, %v412
  %v414 = vpop.f32.mrb[0].mxu0
  %415 = vmatprep.mubr.f32.mxu0 0.0
  %416 = vmatmul.mubr.f32.gmra.mrb[0].mxu0 %v196
  %v417 = vpop.f32.mrb[0].mxu0
  %v418 = vadd.f32 0.0, %v417
  %v419 = vpop.f32.mrb[0].mxu0
  %420 = vmatprep.mubr.f32.mxu0 0.0
  %421 = vmatmul.mubr.f32.gmra.mrb[0].mxu0 %v199
  %v422 = vpop.f32.mrb[0].mxu0
  %v423 = vadd.f32 0.0, %v422
  %v424 = vpop.f32.mrb[0].mxu0
  %425 = vdwg.mxu0
  %v426 = vld [vmem:[%s4] sm:$0xff]
  %v427 = vld [vmem:[%s4 + $0x8] sm:$0xff]
  %v428 = vld [vmem:[%s4 + $0x10] sm:$0xff]
  %v429 = vld [vmem:[%s4 + $0x18] sm:$0xff]
  %v430 = vld [vmem:[%s4 + $0x20] sm:$0xff]
  %v431 = vld [vmem:[%s4 + $0x28] sm:$0xff]
  %v432 = vld [vmem:[%s4 + $0x30] sm:$0xff]
  %v433 = vld [vmem:[%s4 + $0x38] sm:$0xff]
  %v434 = vld [vmem:[%s4 + $0x40] sm:$0xff]
  %v435 = vld [vmem:[%s4 + $0x48] sm:$0xff]
  %v436 = vld [vmem:[%s4 + $0x50] sm:$0xff]
  %v437 = vld [vmem:[%s4 + $0x58] sm:$0xff]
  %v438 = vld [vmem:[%s4 + $0x60] sm:$0xff]
  %v439 = vld [vmem:[%s4 + $0x68] sm:$0xff]
  %v440 = vld [vmem:[%s4 + $0x70] sm:$0xff]
  %v441 = vld [vmem:[%s4 + $0x78] sm:$0xff]
  %v442 = vld [vmem:[%s4 + $0x80] sm:$0xff]
  %v443 = vld [vmem:[%s4 + $0x88] sm:$0xff]
  %v444 = vld [vmem:[%s4 + $0x90] sm:$0xff]
  %v445 = vld [vmem:[%s4 + $0x98] sm:$0xff]
  %v446 = vld [vmem:[%s4 + $0xa0] sm:$0xff]
  %v447 = vld [vmem:[%s4 + $0xa8] sm:$0xff]
  %v448 = vld [vmem:[%s4 + $0xb0] sm:$0xff]
  %v449 = vld [vmem:[%s4 + $0xb8] sm:$0xff]
  %v450 = vld [vmem:[%s4 + $0xc0] sm:$0xff]
  %v451 = vld [vmem:[%s4 + $0xc8] sm:$0xff]
  %v452 = vld [vmem:[%s4 + $0xd0] sm:$0xff]
  %v453 = vld [vmem:[%s4 + $0xd8] sm:$0xff]
  %v454 = vld [vmem:[%s4 + $0xe0] sm:$0xff]
  %v455 = vld [vmem:[%s4 + $0xe8] sm:$0xff]
  %v456 = vld [vmem:[%s4 + $0xf0] sm:$0xff]
  %v457 = vld [vmem:[%s4 + $0xf8] sm:$0xff]
  %vm458 = vcmask 261120
  %v460 = vsel %vm458, %v426, 0
  %v463 = vsel %vm458, %v427, 0
  %v466 = vsel %vm458, %v428, 0
  %v469 = vsel %vm458, %v429, 0
  %v472 = vsel %vm458, %v430, 0
  %v475 = vsel %vm458, %v431, 0
  %v478 = vsel %vm458, %v432, 0
  %v481 = vsel %vm458, %v433, 0
  %v484 = vsel %vm458, %v434, 0
  %v487 = vsel %vm458, %v435, 0
  %v490 = vsel %vm458, %v436, 0
  %v493 = vsel %vm458, %v437, 0
  %v496 = vsel %vm458, %v438, 0
  %v499 = vsel %vm458, %v439, 0
  %v502 = vsel %vm458, %v440, 0
  %v505 = vsel %vm458, %v441, 0
  %v508 = vsel %vm458, %v442, 0
  %v511 = vsel %vm458, %v443, 0
  %v514 = vsel %vm458, %v444, 0
  %v517 = vsel %vm458, %v445, 0
  %v520 = vsel %vm458, %v446, 0
  %v523 = vsel %vm458, %v447, 0
  %v526 = vsel %vm458, %v448, 0
  %v529 = vsel %vm458, %v449, 0
  %v532 = vsel %vm458, %v450, 0
  %v535 = vsel %vm458, %v451, 0
  %v538 = vsel %vm458, %v452, 0
  %v541 = vsel %vm458, %v453, 0
  %v544 = vsel %vm458, %v454, 0
  %v547 = vsel %vm458, %v455, 0
  %v550 = vsel %vm458, %v456, 0
  %v553 = vsel %vm458, %v457, 0
  %555 = vmatprep.subr.mxu0 0.0
  %556 = vmatpush1.msra.mxu0 %v52
  %557 = vmatprep.subr.mxu0 0.0
  %558 = vmatpush1.msra.mxu0 %v53
  %559 = vmatprep.subr.mxu0 0.0
  %560 = vmatpush1.msra.mxu0 %v54
  %561 = vmatprep.subr.mxu0 0.0
  %562 = vmatpush1.msra.mxu0 %v55
  %563 = vmatprep.subr.mxu0 0.0
  %564 = vmatpush1.msra.mxu0 0.0
  %565 = vmatprep.subr.mxu0 0.0
  %566 = vmatpush1.msra.mxu0 0.0
  %567 = vmatprep.subr.mxu0 0.0
  %568 = vmatpush1.msra.mxu0 0.0
  %569 = vmatprep.subr.mxu0 0.0
  %570 = vmatpush1.msra.mxu0 0.0
  %571 = vmatprep.subr.mxu0 0.0
  %572 = vmatpush1.msra.mxu0 0.0
  %573 = vmatprep.subr.mxu0 0.0
  %574 = vmatpush1.msra.mxu0 0.0
  %575 = vmatprep.subr.mxu0 0.0
  %576 = vmatpush1.msra.mxu0 0.0
  %577 = vmatprep.subr.mxu0 0.0
  %578 = vmatpush1.msra.mxu0 0.0
  %579 = vmatprep.subr.mxu0 0.0
  %580 = vmatpush1.msra.mxu0 0.0
  %581 = vmatprep.subr.mxu0 0.0
  %582 = vmatpush1.msra.mxu0 0.0
  %583 = vmatprep.subr.mxu0 0.0
  %584 = vmatpush1.msra.mxu0 0.0
  %585 = vmatprep.subr.mxu0 0.0
  %586 = vmatpush1.msra.mxu0 0.0
  %587 = vmatprep.subr.mxu0 0.0
  %588 = vmatpush1.msra.mxu0 0.0
  %589 = vmatprep.subr.mxu0 0.0
  %590 = vmatpush1.msra.mxu0 0.0
  %591 = vmatprep.subr.mxu0 0.0
  %592 = vmatpush1.msra.mxu0 0.0
  %593 = vmatprep.subr.mxu0 0.0
  %594 = vmatpush1.msra.mxu0 0.0
  %595 = vmatprep.subr.mxu0 0.0
  %596 = vmatpush1.msra.mxu0 0.0
  %597 = vmatprep.subr.mxu0 0.0
  %598 = vmatpush1.msra.mxu0 0.0
  %599 = vmatprep.subr.mxu0 0.0
  %600 = vmatpush1.msra.mxu0 0.0
  %601 = vmatprep.subr.mxu0 0.0
  %602 = vmatpush1.msra.mxu0 0.0
  %603 = vmatprep.subr.mxu0 0.0
  %604 = vmatpush1.msra.mxu0 0.0
  %605 = vmatprep.subr.mxu0 0.0
  %606 = vmatpush1.msra.mxu0 0.0
  %607 = vmatprep.subr.mxu0 0.0
  %608 = vmatpush1.msra.mxu0 0.0
  %609 = vmatprep.subr.mxu0 0.0
  %610 = vmatpush1.msra.mxu0 0.0
  %611 = vmatprep.subr.mxu0 0.0
  %612 = vmatpush1.msra.mxu0 0.0
  %613 = vmatprep.subr.mxu0 0.0
  %614 = vmatpush1.msra.mxu0 0.0
  %615 = vmatprep.subr.mxu0 0.0
  %616 = vmatpush1.msra.mxu0 0.0
  %617 = vmatprep.subr.mxu0 0.0
  %618 = vmatpush1.msra.mxu0 0.0
  %619 = vmatprep.mubr.f32.mxu0 0.0
  %620 = vmatmul.mubr.f32.gmra.mrb[0].mxu0 %v460
  %v621 = vpop.f32.mrb[0].mxu0
  %v622 = vadd.f32 0.0, %v621
  %v623 = vpop.f32.mrb[0].mxu0
  %624 = vmatprep.mubr.f32.mxu0 0.0
  %625 = vmatmul.mubr.f32.gmra.mrb[0].mxu0 %v463
  %v626 = vpop.f32.mrb[0].mxu0
  %v627 = vadd.f32 0.0, %v626
  %v628 = vpop.f32.mrb[0].mxu0
  %629 = vmatprep.mubr.f32.mxu0 0.0
  %630 = vmatmul.mubr.f32.gmra.mrb[0].mxu0 %v466
  %v631 = vpop.f32.mrb[0].mxu0
  %v632 = vadd.f32 0.0, %v631
  %v633 = vpop.f32.mrb[0].mxu0
  %634 = vmatprep.mubr.f32.mxu0 0.0
  %635 = vmatmul.mubr.f32.gmra.mrb[0].mxu0 %v469
  %v636 = vpop.f32.mrb[0].mxu0
  %v637 = vadd.f32 0.0, %v636
  %v638 = vpop.f32.mrb[0].mxu0
  %639 = vmatprep.mubr.f32.mxu0 0.0
  %640 = vmatmul.mubr.f32.gmra.mrb[0].mxu0 %v472
  %v641 = vpop.f32.mrb[0].mxu0
  %v642 = vadd.f32 0.0, %v641
  %v643 = vpop.f32.mrb[0].mxu0
  %644 = vmatprep.mubr.f32.mxu0 0.0
  %645 = vmatmul.mubr.f32.gmra.mrb[0].mxu0 %v475
  %v646 = vpop.f32.mrb[0].mxu0
  %v647 = vadd.f32 0.0, %v646
  %v648 = vpop.f32.mrb[0].mxu0
  %649 = vmatprep.mubr.f32.mxu0 0.0
  %650 = vmatmul.mubr.f32.gmra.mrb[0].mxu0 %v478
  %v651 = vpop.f32.mrb[0].mxu0
  %v652 = vadd.f32 0.0, %v651
  %v653 = vpop.f32.mrb[0].mxu0
  %654 = vmatprep.mubr.f32.mxu0 0.0
  %655 = vmatmul.mubr.f32.gmra.mrb[0].mxu0 %v481
  %v656 = vpop.f32.mrb[0].mxu0
  %v657 = vadd.f32 0.0, %v656
  %v658 = vpop.f32.mrb[0].mxu0
  %659 = vmatprep.mubr.f32.mxu0 0.0
  %660 = vmatmul.mubr.f32.gmra.mrb[0].mxu0 %v484
  %v661 = vpop.f32.mrb[0].mxu0
  %v662 = vadd.f32 0.0, %v661
  %v663 = vpop.f32.mrb[0].mxu0
  %664 = vmatprep.mubr.f32.mxu0 0.0
  %665 = vmatmul.mubr.f32.gmra.mrb[0].mxu0 %v487
  %v666 = vpop.f32.mrb[0].mxu0
  %v667 = vadd.f32 0.0, %v666
  %v668 = vpop.f32.mrb[0].mxu0
  %669 = vmatprep.mubr.f32.mxu0 0.0
  %670 = vmatmul.mubr.f32.gmra.mrb[0].mxu0 %v490
  %v671 = vpop.f32.mrb[0].mxu0
  %v672 = vadd.f32 0.0, %v671
  %v673 = vpop.f32.mrb[0].mxu0
  %674 = vmatprep.mubr.f32.mxu0 0.0
  %675 = vmatmul.mubr.f32.gmra.mrb[0].mxu0 %v493
  %v676 = vpop.f32.mrb[0].mxu0
  %v677 = vadd.f32 0.0, %v676
  %v678 = vpop.f32.mrb[0].mxu0
  %679 = vmatprep.mubr.f32.mxu0 0.0
  %680 = vmatmul.mubr.f32.gmra.mrb[0].mxu0 %v496
  %v681 = vpop.f32.mrb[0].mxu0
  %v682 = vadd.f32 0.0, %v681
  %v683 = vpop.f32.mrb[0].mxu0
  %684 = vmatprep.mubr.f32.mxu0 0.0
  %685 = vmatmul.mubr.f32.gmra.mrb[0].mxu0 %v499
  %v686 = vpop.f32.mrb[0].mxu0
  %v687 = vadd.f32 0.0, %v686
  %v688 = vpop.f32.mrb[0].mxu0
  %689 = vmatprep.mubr.f32.mxu0 0.0
  %690 = vmatmul.mubr.f32.gmra.mrb[0].mxu0 %v502
  %v691 = vpop.f32.mrb[0].mxu0
  %v692 = vadd.f32 0.0, %v691
  %v693 = vpop.f32.mrb[0].mxu0
  %694 = vmatprep.mubr.f32.mxu0 0.0
  %695 = vmatmul.mubr.f32.gmra.mrb[0].mxu0 %v505
  %v696 = vpop.f32.mrb[0].mxu0
  %v697 = vadd.f32 0.0, %v696
  %v698 = vpop.f32.mrb[0].mxu0
  %699 = vmatprep.mubr.f32.mxu0 0.0
  %700 = vmatmul.mubr.f32.gmra.mrb[0].mxu0 %v508
  %v701 = vpop.f32.mrb[0].mxu0
  %v702 = vadd.f32 0.0, %v701
  %v703 = vpop.f32.mrb[0].mxu0
  %704 = vmatprep.mubr.f32.mxu0 0.0
  %705 = vmatmul.mubr.f32.gmra.mrb[0].mxu0 %v511
  %v706 = vpop.f32.mrb[0].mxu0
  %v707 = vadd.f32 0.0, %v706
  %v708 = vpop.f32.mrb[0].mxu0
  %709 = vmatprep.mubr.f32.mxu0 0.0
  %710 = vmatmul.mubr.f32.gmra.mrb[0].mxu0 %v514
  %v711 = vpop.f32.mrb[0].mxu0
  %v712 = vadd.f32 0.0, %v711
  %v713 = vpop.f32.mrb[0].mxu0
  %714 = vmatprep.mubr.f32.mxu0 0.0
  %715 = vmatmul.mubr.f32.gmra.mrb[0].mxu0 %v517
  %v716 = vpop.f32.mrb[0].mxu0
  %v717 = vadd.f32 0.0, %v716
  %v718 = vpop.f32.mrb[0].mxu0
  %719 = vmatprep.mubr.f32.mxu0 0.0
  %720 = vmatmul.mubr.f32.gmra.mrb[0].mxu0 %v520
  %v721 = vpop.f32.mrb[0].mxu0
  %v722 = vadd.f32 0.0, %v721
  %v723 = vpop.f32.mrb[0].mxu0
  %724 = vmatprep.mubr.f32.mxu0 0.0
  %725 = vmatmul.mubr.f32.gmra.mrb[0].mxu0 %v523
  %v726 = vpop.f32.mrb[0].mxu0
  %v727 = vadd.f32 0.0, %v726
  %v728 = vpop.f32.mrb[0].mxu0
  %729 = vmatprep.mubr.f32.mxu0 0.0
  %730 = vmatmul.mubr.f32.gmra.mrb[0].mxu0 %v526
  %v731 = vpop.f32.mrb[0].mxu0
  %v732 = vadd.f32 0.0, %v731
  %v733 = vpop.f32.mrb[0].mxu0
  %734 = vmatprep.mubr.f32.mxu0 0.0
  %735 = vmatmul.mubr.f32.gmra.mrb[0].mxu0 %v529
  %v736 = vpop.f32.mrb[0].mxu0
  %v737 = vadd.f32 0.0, %v736
  %v738 = vpop.f32.mrb[0].mxu0
  %739 = vmatprep.mubr.f32.mxu0 0.0
  %740 = vmatmul.mubr.f32.gmra.mrb[0].mxu0 %v532
  %v741 = vpop.f32.mrb[0].mxu0
  %v742 = vadd.f32 0.0, %v741
  %v743 = vpop.f32.mrb[0].mxu0
  %744 = vmatprep.mubr.f32.mxu0 0.0
  %745 = vmatmul.mubr.f32.gmra.mrb[0].mxu0 %v535
  %v746 = vpop.f32.mrb[0].mxu0
  %v747 = vadd.f32 0.0, %v746
  %v748 = vpop.f32.mrb[0].mxu0
  %749 = vmatprep.mubr.f32.mxu0 0.0
  %750 = vmatmul.mubr.f32.gmra.mrb[0].mxu0 %v538
  %v751 = vpop.f32.mrb[0].mxu0
  %v752 = vadd.f32 0.0, %v751
  %v753 = vpop.f32.mrb[0].mxu0
  %754 = vmatprep.mubr.f32.mxu0 0.0
  %755 = vmatmul.mubr.f32.gmra.mrb[0].mxu0 %v541
  %v756 = vpop.f32.mrb[0].mxu0
  %v757 = vadd.f32 0.0, %v756
  %v758 = vpop.f32.mrb[0].mxu0
  %759 = vmatprep.mubr.f32.mxu0 0.0
  %760 = vmatmul.mubr.f32.gmra.mrb[0].mxu0 %v544
  %v761 = vpop.f32.mrb[0].mxu0
  %v762 = vadd.f32 0.0, %v761
  %v763 = vpop.f32.mrb[0].mxu0
  %764 = vmatprep.mubr.f32.mxu0 0.0
  %765 = vmatmul.mubr.f32.gmra.mrb[0].mxu0 %v547
  %v766 = vpop.f32.mrb[0].mxu0
  %v767 = vadd.f32 0.0, %v766
  %v768 = vpop.f32.mrb[0].mxu0
  %769 = vmatprep.mubr.f32.mxu0 0.0
  %770 = vmatmul.mubr.f32.gmra.mrb[0].mxu0 %v550
  %v771 = vpop.f32.mrb[0].mxu0
  %v772 = vadd.f32 0.0, %v771
  %v773 = vpop.f32.mrb[0].mxu0
  %774 = vmatprep.mubr.f32.mxu0 0.0
  %775 = vmatmul.mubr.f32.gmra.mrb[0].mxu0 %v553
  %v776 = vpop.f32.mrb[0].mxu0
  %v777 = vadd.f32 0.0, %v776
  %v778 = vpop.f32.mrb[0].mxu0
  %779 = vdwg.mxu0
  %780 = vmatprep.subr.mxu0 0.0
  %781 = vmatpush1.msra.mxu0 %v68
  %782 = vmatprep.subr.mxu0 0.0
  %783 = vmatpush1.msra.mxu0 %v69
  %784 = vmatprep.subr.mxu0 0.0
  %785 = vmatpush1.msra.mxu0 %v70
  %786 = vmatprep.subr.mxu0 0.0
  %787 = vmatpush1.msra.mxu0 %v71
  %788 = vmatprep.subr.mxu0 0.0
  %789 = vmatpush1.msra.mxu0 0.0
  %790 = vmatprep.subr.mxu0 0.0
  %791 = vmatpush1.msra.mxu0 0.0
  %792 = vmatprep.subr.mxu0 0.0
  %793 = vmatpush1.msra.mxu0 0.0
  %794 = vmatprep.subr.mxu0 0.0
  %795 = vmatpush1.msra.mxu0 0.0
  %796 = vmatprep.subr.mxu0 0.0
  %797 = vmatpush1.msra.mxu0 0.0
  %798 = vmatprep.subr.mxu0 0.0
  %799 = vmatpush1.msra.mxu0 0.0
  %800 = vmatprep.subr.mxu0 0.0
  %801 = vmatpush1.msra.mxu0 0.0
  %802 = vmatprep.subr.mxu0 0.0
  %803 = vmatpush1.msra.mxu0 0.0
  %804 = vmatprep.subr.mxu0 0.0
  %805 = vmatpush1.msra.mxu0 0.0
  %806 = vmatprep.subr.mxu0 0.0
  %807 = vmatpush1.msra.mxu0 0.0
  %808 = vmatprep.subr.mxu0 0.0
  %809 = vmatpush1.msra.mxu0 0.0
  %810 = vmatprep.subr.mxu0 0.0
  %811 = vmatpush1.msra.mxu0 0.0
  %812 = vmatprep.subr.mxu0 0.0
  %813 = vmatpush1.msra.mxu0 0.0
  %814 = vmatprep.subr.mxu0 0.0
  %815 = vmatpush1.msra.mxu0 0.0
  %816 = vmatprep.subr.mxu0 0.0
  %817 = vmatpush1.msra.mxu0 0.0
  %818 = vmatprep.subr.mxu0 0.0
  %819 = vmatpush1.msra.mxu0 0.0
  %820 = vmatprep.subr.mxu0 0.0
  %821 = vmatpush1.msra.mxu0 0.0
  %822 = vmatprep.subr.mxu0 0.0
  %823 = vmatpush1.msra.mxu0 0.0
  %824 = vmatprep.subr.mxu0 0.0
  %825 = vmatpush1.msra.mxu0 0.0
  %826 = vmatprep.subr.mxu0 0.0
  %827 = vmatpush1.msra.mxu0 0.0
  %828 = vmatprep.subr.mxu0 0.0
  %829 = vmatpush1.msra.mxu0 0.0
  %830 = vmatprep.subr.mxu0 0.0
  %831 = vmatpush1.msra.mxu0 0.0
  %832 = vmatprep.subr.mxu0 0.0
  %833 = vmatpush1.msra.mxu0 0.0
  %834 = vmatprep.subr.mxu0 0.0
  %835 = vmatpush1.msra.mxu0 0.0
  %836 = vmatprep.subr.mxu0 0.0
  %837 = vmatpush1.msra.mxu0 0.0
  %838 = vmatprep.subr.mxu0 0.0
  %839 = vmatpush1.msra.mxu0 0.0
  %840 = vmatprep.subr.mxu0 0.0
  %841 = vmatpush1.msra.mxu0 0.0
  %842 = vmatprep.subr.mxu0 0.0
  %843 = vmatpush1.msra.mxu0 0.0
  %844 = vmatprep.mubr.f32.mxu0 0.0
  %845 = vmatmul.mubr.f32.gmra.mrb[0].mxu0 %v460
  %v846 = vpop.f32.mrb[0].mxu0
  %v847 = vadd.f32 0.0, %v846
  %v848 = vpop.f32.mrb[0].mxu0
  %849 = vmatprep.mubr.f32.mxu0 0.0
  %850 = vmatmul.mubr.f32.gmra.mrb[0].mxu0 %v463
  %v851 = vpop.f32.mrb[0].mxu0
  %v852 = vadd.f32 0.0, %v851
  %v853 = vpop.f32.mrb[0].mxu0
  %854 = vmatprep.mubr.f32.mxu0 0.0
  %855 = vmatmul.mubr.f32.gmra.mrb[0].mxu0 %v466
  %v856 = vpop.f32.mrb[0].mxu0
  %v857 = vadd.f32 0.0, %v856
  %v858 = vpop.f32.mrb[0].mxu0
  %859 = vmatprep.mubr.f32.mxu0 0.0
  %860 = vmatmul.mubr.f32.gmra.mrb[0].mxu0 %v469
  %v861 = vpop.f32.mrb[0].mxu0
  %v862 = vadd.f32 0.0, %v861
  %v863 = vpop.f32.mrb[0].mxu0
  %864 = vmatprep.mubr.f32.mxu0 0.0
  %865 = vmatmul.mubr.f32.gmra.mrb[0].mxu0 %v472
  %v866 = vpop.f32.mrb[0].mxu0
  %v867 = vadd.f32 0.0, %v866
  %v868 = vpop.f32.mrb[0].mxu0
  %869 = vmatprep.mubr.f32.mxu0 0.0
  %870 = vmatmul.mubr.f32.gmra.mrb[0].mxu0 %v475
  %v871 = vpop.f32.mrb[0].mxu0
  %v872 = vadd.f32 0.0, %v871
  %v873 = vpop.f32.mrb[0].mxu0
  %874 = vmatprep.mubr.f32.mxu0 0.0
  %875 = vmatmul.mubr.f32.gmra.mrb[0].mxu0 %v478
  %v876 = vpop.f32.mrb[0].mxu0
  %v877 = vadd.f32 0.0, %v876
  %v878 = vpop.f32.mrb[0].mxu0
  %879 = vmatprep.mubr.f32.mxu0 0.0
  %880 = vmatmul.mubr.f32.gmra.mrb[0].mxu0 %v481
  %v881 = vpop.f32.mrb[0].mxu0
  %v882 = vadd.f32 0.0, %v881
  %v883 = vpop.f32.mrb[0].mxu0
  %884 = vmatprep.mubr.f32.mxu0 0.0
  %885 = vmatmul.mubr.f32.gmra.mrb[0].mxu0 %v484
  %v886 = vpop.f32.mrb[0].mxu0
  %v887 = vadd.f32 0.0, %v886
  %v888 = vpop.f32.mrb[0].mxu0
  %889 = vmatprep.mubr.f32.mxu0 0.0
  %890 = vmatmul.mubr.f32.gmra.mrb[0].mxu0 %v487
  %v891 = vpop.f32.mrb[0].mxu0
  %v892 = vadd.f32 0.0, %v891
  %v893 = vpop.f32.mrb[0].mxu0
  %894 = vmatprep.mubr.f32.mxu0 0.0
  %895 = vmatmul.mubr.f32.gmra.mrb[0].mxu0 %v490
  %v896 = vpop.f32.mrb[0].mxu0
  %v897 = vadd.f32 0.0, %v896
  %v898 = vpop.f32.mrb[0].mxu0
  %899 = vmatprep.mubr.f32.mxu0 0.0
  %900 = vmatmul.mubr.f32.gmra.mrb[0].mxu0 %v493
  %v901 = vpop.f32.mrb[0].mxu0
  %v902 = vadd.f32 0.0, %v901
  %v903 = vpop.f32.mrb[0].mxu0
  %904 = vmatprep.mubr.f32.mxu0 0.0
  %905 = vmatmul.mubr.f32.gmra.mrb[0].mxu0 %v496
  %v906 = vpop.f32.mrb[0].mxu0
  %v907 = vadd.f32 0.0, %v906
  %v908 = vpop.f32.mrb[0].mxu0
  %909 = vmatprep.mubr.f32.mxu0 0.0
  %910 = vmatmul.mubr.f32.gmra.mrb[0].mxu0 %v499
  %v911 = vpop.f32.mrb[0].mxu0
  %v912 = vadd.f32 0.0, %v911
  %v913 = vpop.f32.mrb[0].mxu0
  %914 = vmatprep.mubr.f32.mxu0 0.0
  %915 = vmatmul.mubr.f32.gmra.mrb[0].mxu0 %v502
  %v916 = vpop.f32.mrb[0].mxu0
  %v917 = vadd.f32 0.0, %v916
  %v918 = vpop.f32.mrb[0].mxu0
  %919 = vmatprep.mubr.f32.mxu0 0.0
  %920 = vmatmul.mubr.f32.gmra.mrb[0].mxu0 %v505
  %v921 = vpop.f32.mrb[0].mxu0
  %v922 = vadd.f32 0.0, %v921
  %v923 = vpop.f32.mrb[0].mxu0
  %924 = vmatprep.mubr.f32.mxu0 0.0
  %925 = vmatmul.mubr.f32.gmra.mrb[0].mxu0 %v508
  %v926 = vpop.f32.mrb[0].mxu0
  %v927 = vadd.f32 0.0, %v926
  %v928 = vpop.f32.mrb[0].mxu0
  %929 = vmatprep.mubr.f32.mxu0 0.0
  %930 = vmatmul.mubr.f32.gmra.mrb[0].mxu0 %v511
  %v931 = vpop.f32.mrb[0].mxu0
  %v932 = vadd.f32 0.0, %v931
  %v933 = vpop.f32.mrb[0].mxu0
  %934 = vmatprep.mubr.f32.mxu0 0.0
  %935 = vmatmul.mubr.f32.gmra.mrb[0].mxu0 %v514
  %v936 = vpop.f32.mrb[0].mxu0
  %v937 = vadd.f32 0.0, %v936
  %v938 = vpop.f32.mrb[0].mxu0
  %939 = vmatprep.mubr.f32.mxu0 0.0
  %940 = vmatmul.mubr.f32.gmra.mrb[0].mxu0 %v517
  %v941 = vpop.f32.mrb[0].mxu0
  %v942 = vadd.f32 0.0, %v941
  %v943 = vpop.f32.mrb[0].mxu0
  %944 = vmatprep.mubr.f32.mxu0 0.0
  %945 = vmatmul.mubr.f32.gmra.mrb[0].mxu0 %v520
  %v946 = vpop.f32.mrb[0].mxu0
  %v947 = vadd.f32 0.0, %v946
  %v948 = vpop.f32.mrb[0].mxu0
  %949 = vmatprep.mubr.f32.mxu0 0.0
  %950 = vmatmul.mubr.f32.gmra.mrb[0].mxu0 %v523
  %v951 = vpop.f32.mrb[0].mxu0
  %v952 = vadd.f32 0.0, %v951
  %v953 = vpop.f32.mrb[0].mxu0
  %954 = vmatprep.mubr.f32.mxu0 0.0
  %955 = vmatmul.mubr.f32.gmra.mrb[0].mxu0 %v526
  %v956 = vpop.f32.mrb[0].mxu0
  %v957 = vadd.f32 0.0, %v956
  %v958 = vpop.f32.mrb[0].mxu0
  %959 = vmatprep.mubr.f32.mxu0 0.0
  %960 = vmatmul.mubr.f32.gmra.mrb[0].mxu0 %v529
  %v961 = vpop.f32.mrb[0].mxu0
  %v962 = vadd.f32 0.0, %v961
  %v963 = vpop.f32.mrb[0].mxu0
  %964 = vmatprep.mubr.f32.mxu0 0.0
  %965 = vmatmul.mubr.f32.gmra.mrb[0].mxu0 %v532
  %v966 = vpop.f32.mrb[0].mxu0
  %v967 = vadd.f32 0.0, %v966
  %v968 = vpop.f32.mrb[0].mxu0
  %969 = vmatprep.mubr.f32.mxu0 0.0
  %970 = vmatmul.mubr.f32.gmra.mrb[0].mxu0 %v535
  %v971 = vpop.f32.mrb[0].mxu0
  %v972 = vadd.f32 0.0, %v971
  %v973 = vpop.f32.mrb[0].mxu0
  %974 = vmatprep.mubr.f32.mxu0 0.0
  %975 = vmatmul.mubr.f32.gmra.mrb[0].mxu0 %v538
  %v976 = vpop.f32.mrb[0].mxu0
  %v977 = vadd.f32 0.0, %v976
  %v978 = vpop.f32.mrb[0].mxu0
  %979 = vmatprep.mubr.f32.mxu0 0.0
  %980 = vmatmul.mubr.f32.gmra.mrb[0].mxu0 %v541
  %v981 = vpop.f32.mrb[0].mxu0
  %v982 = vadd.f32 0.0, %v981
  %v983 = vpop.f32.mrb[0].mxu0
  %984 = vmatprep.mubr.f32.mxu0 0.0
  %985 = vmatmul.mubr.f32.gmra.mrb[0].mxu0 %v544
  %v986 = vpop.f32.mrb[0].mxu0
  %v987 = vadd.f32 0.0, %v986
  %v988 = vpop.f32.mrb[0].mxu0
  %989 = vmatprep.mubr.f32.mxu0 0.0
  %990 = vmatmul.mubr.f32.gmra.mrb[0].mxu0 %v547
  %v991 = vpop.f32.mrb[0].mxu0
  %v992 = vadd.f32 0.0, %v991
  %v993 = vpop.f32.mrb[0].mxu0
  %994 = vmatprep.mubr.f32.mxu0 0.0
  %995 = vmatmul.mubr.f32.gmra.mrb[0].mxu0 %v550
  %v996 = vpop.f32.mrb[0].mxu0
  %v997 = vadd.f32 0.0, %v996
  %v998 = vpop.f32.mrb[0].mxu0
  %999 = vmatprep.mubr.f32.mxu0 0.0
  %1000 = vmatmul.mubr.f32.gmra.mrb[0].mxu0 %v553
  %v1001 = vpop.f32.mrb[0].mxu0
  %v1002 = vadd.f32 0.0, %v1001
  %v1003 = vpop.f32.mrb[0].mxu0
  %1004 = vdwg.mxu0
  %v1005 = vmul.f32 %v268, %v622
  %v1006 = vmul.f32 %v273, %v627
  %v1007 = vmul.f32 %v278, %v632
  %v1008 = vmul.f32 %v283, %v637
  %v1009 = vmul.f32 %v288, %v642
  %v1010 = vmul.f32 %v293, %v647
  %v1011 = vmul.f32 %v298, %v652
  %v1012 = vmul.f32 %v303, %v657
  %v1013 = vmul.f32 %v308, %v662
  %v1014 = vmul.f32 %v313, %v667
  %v1015 = vmul.f32 %v318, %v672
  %v1016 = vmul.f32 %v323, %v677
  %v1017 = vmul.f32 %v328, %v682
  %v1018 = vmul.f32 %v333, %v687
  %v1019 = vmul.f32 %v338, %v692
  %v1020 = vmul.f32 %v343, %v697
  %v1021 = vmul.f32 %v348, %v702
  %v1022 = vmul.f32 %v353, %v707
  %v1023 = vmul.f32 %v358, %v712
  %v1024 = vmul.f32 %v363, %v717
  %v1025 = vmul.f32 %v368, %v722
  %v1026 = vmul.f32 %v373, %v727
  %v1027 = vmul.f32 %v378, %v732
  %v1028 = vmul.f32 %v383, %v737
  %v1029 = vmul.f32 %v388, %v742
  %v1030 = vmul.f32 %v393, %v747
  %v1031 = vmul.f32 %v398, %v752
  %v1032 = vmul.f32 %v403, %v757
  %v1033 = vmul.f32 %v408, %v762
  %v1034 = vmul.f32 %v413, %v767
  %v1035 = vmul.f32 %v418, %v772
  %v1036 = vmul.f32 %v423, %v777
  %v1037 = vadd.f32 %v1005, %v1006
  %v1038 = vadd.f32 %v1037, %v1007
  %v1039 = vadd.f32 %v1038, %v1008
  %v1040 = vadd.f32 %v1039, %v1009
  %v1041 = vadd.f32 %v1040, %v1010
  %v1042 = vadd.f32 %v1041, %v1011
  %v1043 = vadd.f32 %v1042, %v1012
  %v1044 = vadd.f32 %v1043, %v1013
  %v1045 = vadd.f32 %v1044, %v1014
  %v1046 = vadd.f32 %v1045, %v1015
  %v1047 = vadd.f32 %v1046, %v1016
  %v1048 = vadd.f32 %v1047, %v1017
  %v1049 = vadd.f32 %v1048, %v1018
  %v1050 = vadd.f32 %v1049, %v1019
  %v1051 = vadd.f32 %v1050, %v1020
  %v1052 = vadd.f32 %v1051, %v1021
  %v1053 = vadd.f32 %v1052, %v1022
  %v1054 = vadd.f32 %v1053, %v1023
  %v1055 = vadd.f32 %v1054, %v1024
  %v1056 = vadd.f32 %v1055, %v1025
  %v1057 = vadd.f32 %v1056, %v1026
  %v1058 = vadd.f32 %v1057, %v1027
  %v1059 = vadd.f32 %v1058, %v1028
  %v1060 = vadd.f32 %v1059, %v1029
  %v1061 = vadd.f32 %v1060, %v1030
  %v1062 = vadd.f32 %v1061, %v1031
  %v1063 = vadd.f32 %v1062, %v1032
  %v1064 = vadd.f32 %v1063, %v1033
  %v1065 = vadd.f32 %v1064, %v1034
  %v1066 = vadd.f32 %v1065, %v1035
  %v1067 = vadd.f32 %v1066, %v1036
  %v1068 = vrot.slane %v1067, 4
  %v1069 = vadd.f32 %v1067, %v1068
  %v1070 = vrot.slane %v1069, 2
  %v1071 = vadd.f32 %v1069, %v1070
  %v1072 = vrot.slane %v1071, 1
  %v1073 = vadd.f32 %v1071, %v1072
  %1074 = vst [vmem:[%s5] sm:$0x1] %v1073
  %v1075 = vmul.f32 %v268, %v847
  %v1076 = vmul.f32 %v273, %v852
  %v1077 = vmul.f32 %v278, %v857
  %v1078 = vmul.f32 %v283, %v862
  %v1079 = vmul.f32 %v288, %v867
  %v1080 = vmul.f32 %v293, %v872
  %v1081 = vmul.f32 %v298, %v877
  %v1082 = vmul.f32 %v303, %v882
  %v1083 = vmul.f32 %v308, %v887
  %v1084 = vmul.f32 %v313, %v892
  %v1085 = vmul.f32 %v318, %v897
  %v1086 = vmul.f32 %v323, %v902
  %v1087 = vmul.f32 %v328, %v907
  %v1088 = vmul.f32 %v333, %v912
  %v1089 = vmul.f32 %v338, %v917
  %v1090 = vmul.f32 %v343, %v922
  %v1091 = vmul.f32 %v348, %v927
  %v1092 = vmul.f32 %v353, %v932
  %v1093 = vmul.f32 %v358, %v937
  %v1094 = vmul.f32 %v363, %v942
  %v1095 = vmul.f32 %v368, %v947
  %v1096 = vmul.f32 %v373, %v952
  %v1097 = vmul.f32 %v378, %v957
  %v1098 = vmul.f32 %v383, %v962
  %v1099 = vmul.f32 %v388, %v967
  %v1100 = vmul.f32 %v393, %v972
  %v1101 = vmul.f32 %v398, %v977
  %v1102 = vmul.f32 %v403, %v982
  %v1103 = vmul.f32 %v408, %v987
  %v1104 = vmul.f32 %v413, %v992
  %v1105 = vmul.f32 %v418, %v997
  %v1106 = vmul.f32 %v423, %v1002
  %v1107 = vadd.f32 %v1075, %v1076
  %v1108 = vadd.f32 %v1107, %v1077
  %v1109 = vadd.f32 %v1108, %v1078
  %v1110 = vadd.f32 %v1109, %v1079
  %v1111 = vadd.f32 %v1110, %v1080
  %v1112 = vadd.f32 %v1111, %v1081
  %v1113 = vadd.f32 %v1112, %v1082
  %v1114 = vadd.f32 %v1113, %v1083
  %v1115 = vadd.f32 %v1114, %v1084
  %v1116 = vadd.f32 %v1115, %v1085
  %v1117 = vadd.f32 %v1116, %v1086
  %v1118 = vadd.f32 %v1117, %v1087
  %v1119 = vadd.f32 %v1118, %v1088
  %v1120 = vadd.f32 %v1119, %v1089
  %v1121 = vadd.f32 %v1120, %v1090
  %v1122 = vadd.f32 %v1121, %v1091
  %v1123 = vadd.f32 %v1122, %v1092
  %v1124 = vadd.f32 %v1123, %v1093
  %v1125 = vadd.f32 %v1124, %v1094
  %v1126 = vadd.f32 %v1125, %v1095
  %v1127 = vadd.f32 %v1126, %v1096
  %v1128 = vadd.f32 %v1127, %v1097
  %v1129 = vadd.f32 %v1128, %v1098
  %v1130 = vadd.f32 %v1129, %v1099
  %v1131 = vadd.f32 %v1130, %v1100
  %v1132 = vadd.f32 %v1131, %v1101
  %v1133 = vadd.f32 %v1132, %v1102
  %v1134 = vadd.f32 %v1133, %v1103
  %v1135 = vadd.f32 %v1134, %v1104
  %v1136 = vadd.f32 %v1135, %v1105
  %v1137 = vadd.f32 %v1136, %v1106
  %v1138 = vrot.slane %v1137, 4
  %v1139 = vadd.f32 %v1137, %v1138
  %v1140 = vrot.slane %v1139, 2
  %v1141 = vadd.f32 %v1139, %v1140
  %v1142 = vrot.slane %v1141, 1
  %v1143 = vadd.f32 %v1141, %v1142
  %1144 = vst [vmem:[%s6] sm:$0x1] %v1143
  // Predicated region
  $region22: #{bprmf_forward.1} parent=0 // pred_check
    _
  $region23: #{bprmf_forward.1} parent=0 // pred_check_branch
    %1146 = sbr.rel (0) target = $region25
  $region24: #{bprmf_forward.1} parent=0 // pred_region
    _
  $region25: #{bprmf_forward.1} parent=0 // pred_fallthru
    _
  // Predicated region
  $region26: #{bprmf_forward.1} parent=0 // pred_check
    _
  $region27: #{bprmf_forward.1} parent=0 // pred_check_branch
    %1148 = sbr.rel (0) target = $region29
  $region28: #{bprmf_forward.1} parent=0 // pred_region
    _
  $region29: #{bprmf_forward.1} parent=0 // pred_fallthru
    _
  // Predicated region
  $region30: #{bprmf_forward.1} parent=0 // pred_check
    _
  $region31: #{bprmf_forward.1} parent=0 // pred_check_branch
    %1150 = sbr.rel (0) target = $region33
  $region32: #{bprmf_forward.1} parent=0 // pred_region
    _
  $region33: #{bprmf_forward.1} parent=0 // pred_fallthru
    _
  // Predicated region
  $region34: #{bprmf_forward.1} parent=0 // pred_check
    _
  $region35: #{bprmf_forward.1} parent=0 // pred_check_branch
    %1152 = sbr.rel (0) target = $region37
  $region36: #{bprmf_forward.1} parent=0 // pred_region
    _
  $region37: #{bprmf_forward.1} parent=0 // pred_fallthru
    _

</llo_original>
